<compile_context>
chip_gen: v6e
topology: v6e:2x2x1
jax: 0.10.0
libtpu: 0.0.40
codegen_flags: <defaults>
</compile_context>

<pallas_src>
import math

import numpy as np

import jax
import jax.numpy as jnp
from jax.experimental import pallas as pl
from jax.experimental.pallas import tpu as pltpu


def _round_up(x, m):
    return ((x + m - 1) // m) * m


# --------------------------------------------------------------------------
# Kernel: 3-layer MLP (Linear+ReLU, Linear+ReLU, Linear+Tanh) / 100
# with the torch.cat fused into split matmuls on both ends.
# --------------------------------------------------------------------------
def policy_mlp_kernel(xm_ref, xp_ref,
                      w1m_ref, w1p_ref, b1_ref,
                      w2_ref, b2_ref,
                      w3m_ref, b3m_ref, w3p_ref, b3p_ref,
                      om_ref, op_ref):
    cdt = w1m_ref.dtype  # bf16 MXU operand dtype

    xm = xm_ref[...].astype(cdt)            # (TB, d)
    xp = xp_ref[...].astype(cdt)            # (TB, d*d)

    # Fused concat: [mean ; prec_flat] @ W1 == mean @ W1m + prec_flat @ W1p
    h1 = (jnp.dot(xm, w1m_ref[...], preferred_element_type=jnp.float32)
          + jnp.dot(xp, w1p_ref[...], preferred_element_type=jnp.float32))
    h1 = jnp.maximum(h1 + b1_ref[...], 0.0)                     # (TB, 256) f32

    h2 = jnp.dot(h1.astype(cdt), w2_ref[...],
                 preferred_element_type=jnp.float32)
    h2 = jnp.maximum(h2 + b2_ref[...], 0.0)                     # (TB, 256) f32
    h2c = h2.astype(cdt)

    # Split layer 3 -> two lane-aligned, lane-padded outputs.
    ym = jnp.tanh(jnp.dot(h2c, w3m_ref[...],
                          preferred_element_type=jnp.float32)
                  + b3m_ref[...]) / 100.0                       # (TB, d_pad)
    yp = jnp.tanh(jnp.dot(h2c, w3p_ref[...],
                          preferred_element_type=jnp.float32)
                  + b3p_ref[...]) / 100.0                       # (TB, dd_pad)

    om_ref[...] = ym.astype(om_ref.dtype)
    op_ref[...] = yp.astype(op_ref.dtype)


# --------------------------------------------------------------------------
# Batch-tile planning: balanced tiles, sublane-aligned, VMEM-aware cap.
# --------------------------------------------------------------------------
def _plan_batch_tiles(batch, target_rows, align, min_tiles=1):
    target_rows = max(align, (target_rows // align) * align)
    num_tiles = max(min_tiles, pl.cdiv(batch, target_rows))
    num_tiles = min(num_tiles, max(1, pl.cdiv(batch, align)))
    tile_b = _round_up(pl.cdiv(batch, num_tiles), align)
    return tile_b, num_tiles, tile_b * num_tiles


# --------------------------------------------------------------------------
# Batched forward: means (B, d), precision_components (B, d, d)
# --------------------------------------------------------------------------
def policy_net_forward_batched(means, precision_components, params, *,
                               block_rows=1024,
                               out_dtype=jnp.bfloat16,
                               min_grid_steps=1,
                               vmem_limit_bytes=48 * 1024 * 1024):
    B, d = means.shape
    dd = d * d
    d_pad = _round_up(d, 128)
    dd_pad = _round_up(dd, 128)

    w1m, w1p, b1, w2, b2, w3m, b3m, w3p, b3p = params
    assert w3m.shape[1] == d_pad and w3p.shape[1] == dd_pad

    precs = precision_components.reshape(B, dd)

    # --- VMEM-aware batch-tile cap (sized against the xp *input* tile,
    #     which is the first thing to blow VMEM on v7x as d grows) ----------
    in_bytes = means.dtype.itemsize
    out_bytes = np.dtype(out_dtype).itemsize
    w_bytes = sum(int(a.size) * a.dtype.itemsize
                  for a in (w1m, w1p, b1, w2, b2, w3m, b3m, w3p, b3p))
    per_row = ((d + dd) * in_bytes * 2              # xm + xp, double-buffered
               + (d_pad + dd_pad) * out_bytes * 2   # outputs, double-buffered
               + 2 * 256 * 4                        # h1, h2 f32 intermediates
               + (d_pad + dd_pad) * 4)              # layer-3 f32 pre-tanh temps
    budget = int(vmem_limit_bytes * 0.85)
    cap_rows = max(16, ((budget - w_bytes) // per_row) // 16 * 16)

    # Multiple of 16 keeps bf16 sublane packing happy for both I/O dtypes.
    tile_b, num_tiles, b_pad = _plan_batch_tiles(
        B, min(block_rows, cap_rows), align=16, min_tiles=min_grid_steps)

    if b_pad != B:
        means = jnp.pad(means, ((0, b_pad - B), (0, 0)))
        precs = jnp.pad(precs, ((0, b_pad - B), (0, 0)))

    row_map = lambda i: (i, 0)        # per-batch-tile blocks
    const_map = lambda i: (0, 0)      # weights/biases resident across grid

    def const_spec(a):
        # Resident + single-buffered (halves resident weight VMEM).
        return pl.BlockSpec(a.shape, const_map, pipeline_mode=pl.Buffered(1))

    out_m, out_p = pl.pallas_call(
        policy_mlp_kernel,
        out_shape=(jax.ShapeDtypeStruct((b_pad, d_pad), out_dtype),
                   jax.ShapeDtypeStruct((b_pad, dd_pad), out_dtype)),
        grid=(num_tiles,),
        in_specs=[
            pl.BlockSpec((tile_b, d), row_map),          # means
            pl.BlockSpec((tile_b, dd), row_map),         # precision (flat)
            const_spec(w1m), const_spec(w1p), const_spec(b1),
            const_spec(w2), const_spec(b2),
            const_spec(w3m), const_spec(b3m),
            const_spec(w3p), const_spec(b3p),
        ],
        out_specs=(pl.BlockSpec((tile_b, d_pad), row_map),
                   pl.BlockSpec((tile_b, dd_pad), row_map)),
        compiler_params=pltpu.CompilerParams(
            dimension_semantics=("parallel",),
            vmem_limit_bytes=int(vmem_limit_bytes)),
    )(means, precs, w1m, w1p, b1, w2, b2, w3m, b3m, w3p, b3p)

    # Lane-aligned slices (start at lane 0) -> pure metadata downstream.
    mean_update = out_m[:B, :d]
    precision_component_update = out_p[:B, :dd].reshape(B, d, d)
    return mean_update, precision_component_update


# --------------------------------------------------------------------------
# Single-sample forward matching the PyTorch PolicyNet.forward signature.
# TODO(synk): for latency-critical single-sample use, batch candidates at the
# caller or keep weights resident across calls (cross-pallas_call prefetch);
# this path re-DMAs the weights every call.
# --------------------------------------------------------------------------
def policy_net_forward(mean, precision_component, params):
    mu, pu = policy_net_forward_batched(
        mean[None, :], precision_component[None, :, :], params, block_rows=16)
    return mu[0], pu[0]


# --------------------------------------------------------------------------
# Parameter init (mirrors nn.Linear default: U(-1/sqrt(fan_in), 1/sqrt(fan_in)))
# Weights stored transposed (in, out) in bf16; W1 and W3 pre-split, W3/b3
# lane-padded per split.
# --------------------------------------------------------------------------
def init_params(key, input_dim, weight_dtype=jnp.bfloat16):
    d = input_dim
    dd = d * d
    f = dd + d
    d_pad = _round_up(d, 128)
    dd_pad = _round_up(dd, 128)

    raw = []
    for fan_in, fan_out in [(f, 256), (256, 256), (256, f)]:
        key, kw, kb = jax.random.split(key, 3)
        bound = 1.0 / math.sqrt(fan_in)
        w = jax.random.uniform(kw, (fan_in, fan_out), jnp.float32, -bound, bound)
        b = jax.random.uniform(kb, (1, fan_out), jnp.float32, -bound, bound)
        raw.append((w, b))
    (w1, b1), (w2, b2), (w3, b3) = raw

    w1m, w1p = w1[:d], w1[d:]                              # fused-concat split
    w3m = jnp.pad(w3[:, :d], ((0, 0), (0, d_pad - d)))     # lane-aligned outputs
    w3p = jnp.pad(w3[:, d:], ((0, 0), (0, dd_pad - dd)))
    b3m = jnp.pad(b3[:, :d], ((0, 0), (0, d_pad - d)))
    b3p = jnp.pad(b3[:, d:], ((0, 0), (0, dd_pad - dd)))

    # TODO(synk): on v7x optionally cast w1p/w3p to fp8 e4m3 with per-column
    # scales folded into the f32 epilogue (not a drop-in for v5e/v6e).
    return (w1m.astype(weight_dtype), w1p.astype(weight_dtype), b1,
            w2.astype(weight_dtype), b2,
            w3m.astype(weight_dtype), b3m,
            w3p.astype(weight_dtype), b3p)


def _reference_batched(means, precision_components, params):
    """Pure-JAX f32 reference (weights upcast) for sanity checking."""
    B, d = means.shape
    dd = d * d
    w1m, w1p, b1, w2, b2, w3m, b3m, w3p, b3p = params
    x = jnp.concatenate([means.astype(jnp.float32),
                         precision_components.reshape(B, dd).astype(jnp.float32)],
                        axis=1)
    w1 = jnp.concatenate([w1m, w1p], axis=0).astype(jnp.float32)
    h1 = jnp.maximum(x @ w1 + b1, 0.0)
    h2 = jnp.maximum(h1 @ w2.astype(jnp.float32) + b2, 0.0)
    w3 = jnp.concatenate([w3m[:, :d], w3p[:, :dd]], axis=1).astype(jnp.float32)
    b3 = jnp.concatenate([b3m[:, :d], b3p[:, :dd]], axis=1)
    y = jnp.tanh(h2 @ w3 + b3) / 100.0
    return y[:, :d], y[:, d:].reshape(B, d, d)


if __name__ == "__main__":
    input_dim = 8          # d*d + d = 72 features (split & lane-padded inside)
    batch = 16             # batched candidate evaluation

    key = jax.random.PRNGKey(0)
    k_mean, k_prec, k_params = jax.random.split(key, 3)

    # Producer supplies bf16 (the kernel downcasts to bf16 anyway, so this
    # costs no extra accuracy but halves the input DMA).
    means = jax.random.normal(
        k_mean, (batch, input_dim), jnp.float32).astype(jnp.bfloat16)
    precision_components = jax.random.normal(
        k_prec, (batch, input_dim, input_dim), jnp.float32).astype(jnp.bfloat16)
    params = init_params(k_params, input_dim)

    # Batched path (main perf path)
    mu_b, pu_b = policy_net_forward_batched(means, precision_components, params)
    jax.block_until_ready((mu_b, pu_b))
    assert mu_b.shape == (batch, input_dim)
    assert pu_b.shape == (batch, input_dim, input_dim)

    # Single-sample path matching PolicyNet.forward
    mu_1, pu_1 = policy_net_forward(means[0], precision_components[0], params)
    jax.block_until_ready((mu_1, pu_1))
    assert mu_1.shape == (input_dim,)
    assert pu_1.shape == (input_dim, input_dim)

    # Numerical sanity check vs f32 reference (bf16 weights/activations/outputs;
    # output magnitude bounded by 0.01 from tanh/100).
    mu_ref, pu_ref = _reference_batched(means, precision_components, params)
    err = max(float(jnp.max(jnp.abs(mu_b.astype(jnp.float32) - mu_ref))),
              float(jnp.max(jnp.abs(pu_b.astype(jnp.float32) - pu_ref))))
    assert err < 2e-3, f"numerical mismatch: {err}"
    assert float(jnp.max(jnp.abs(mu_1.astype(jnp.float32) - mu_ref[0]))) < 2e-3

    # Awkward (non-multiple-of-16) batch exercises the balanced-padding path.
    mu_o, pu_o = policy_net_forward_batched(
        means[:13], precision_components[:13], params)
    jax.block_until_ready((mu_o, pu_o))
    assert mu_o.shape == (13, input_dim)
    assert float(jnp.max(jnp.abs(mu_o.astype(jnp.float32) - mu_ref[:13]))) < 2e-3

    print("KERNEL_OK")
</pallas_src>

<mosaic_0001>
module attributes {stable_mosaic.version = 11 : i64} {
  func.func @policy_mlp_kernel(%arg0: i32, %arg1: memref<16x8xbf16, #tpu.memory_space<vmem>>, %arg2: memref<16x64xbf16, #tpu.memory_space<vmem>>, %arg3: memref<8x256xbf16, #tpu.memory_space<vmem>>, %arg4: memref<64x256xbf16, #tpu.memory_space<vmem>>, %arg5: memref<1x256xf32, #tpu.memory_space<vmem>>, %arg6: memref<256x256xbf16, #tpu.memory_space<vmem>>, %arg7: memref<1x256xf32, #tpu.memory_space<vmem>>, %arg8: memref<256x128xbf16, #tpu.memory_space<vmem>>, %arg9: memref<1x128xf32, #tpu.memory_space<vmem>>, %arg10: memref<256x128xbf16, #tpu.memory_space<vmem>>, %arg11: memref<1x128xf32, #tpu.memory_space<vmem>>, %arg12: memref<16x128xbf16, #tpu.memory_space<vmem>>, %arg13: memref<16x128xbf16, #tpu.memory_space<vmem>>) attributes {dimension_semantics = [#tpu.dimension_semantics<parallel>], iteration_bounds = array<i64: 1>, scalar_prefetch = 0 : i64, scratch_operands = 0 : i64, tpu.core_type = #tpu.core_type<tc>, window_params = [{transform_indices = @transform_0, window_bounds = array<i64: 16, 8>}, {transform_indices = @transform_1, window_bounds = array<i64: 16, 64>}, {pipeline_mode = #tpu.pipeline_mode<synchronous>, transform_indices = @transform_2, window_bounds = array<i64: 8, 256>}, {pipeline_mode = #tpu.pipeline_mode<synchronous>, transform_indices = @transform_3, window_bounds = array<i64: 64, 256>}, {pipeline_mode = #tpu.pipeline_mode<synchronous>, transform_indices = @transform_4, window_bounds = array<i64: 1, 256>}, {pipeline_mode = #tpu.pipeline_mode<synchronous>, transform_indices = @transform_5, window_bounds = array<i64: 256, 256>}, {pipeline_mode = #tpu.pipeline_mode<synchronous>, transform_indices = @transform_6, window_bounds = array<i64: 1, 256>}, {pipeline_mode = #tpu.pipeline_mode<synchronous>, transform_indices = @transform_7, window_bounds = array<i64: 256, 128>}, {pipeline_mode = #tpu.pipeline_mode<synchronous>, transform_indices = @transform_8, window_bounds = array<i64: 1, 128>}, {pipeline_mode = #tpu.pipeline_mode<synchronous>, transform_indices = @transform_9, window_bounds = array<i64: 256, 128>}, {pipeline_mode = #tpu.pipeline_mode<synchronous>, transform_indices = @transform_10, window_bounds = array<i64: 1, 128>}, {transform_indices = @transform_11, window_bounds = array<i64: 16, 128>}, {transform_indices = @transform_12, window_bounds = array<i64: 16, 128>}]} {
    %c0 = arith.constant 0 : index
    %c0_0 = arith.constant 0 : index
    %0 = vector.load %arg1[%c0, %c0_0] : memref<16x8xbf16, #tpu.memory_space<vmem>>, vector<16x8xbf16>
    %c0_1 = arith.constant 0 : index
    %c0_2 = arith.constant 0 : index
    %1 = vector.load %arg2[%c0_1, %c0_2] : memref<16x64xbf16, #tpu.memory_space<vmem>>, vector<16x64xbf16>
    %c0_3 = arith.constant 0 : index
    %c0_4 = arith.constant 0 : index
    %2 = vector.load %arg3[%c0_3, %c0_4] : memref<8x256xbf16, #tpu.memory_space<vmem>>, vector<8x256xbf16>
    %cst = arith.constant dense<0.000000e+00> : vector<16x256xf32>
    %3 = tpu.matmul %0, %2, %cst {dimension_numbers = #tpu.dot_dimension_numbers<[1], [0], [0], [1], [0, 0, 1, 1], [], []>} : vector<16x8xbf16>, vector<8x256xbf16>, vector<16x256xf32> -> vector<16x256xf32>
    %c0_5 = arith.constant 0 : index
    %c0_6 = arith.constant 0 : index
    %4 = vector.load %arg4[%c0_5, %c0_6] : memref<64x256xbf16, #tpu.memory_space<vmem>>, vector<64x256xbf16>
    %cst_7 = arith.constant dense<0.000000e+00> : vector<16x256xf32>
    %5 = tpu.matmul %1, %4, %cst_7 {dimension_numbers = #tpu.dot_dimension_numbers<[1], [0], [0], [1], [0, 0, 1, 1], [], []>} : vector<16x64xbf16>, vector<64x256xbf16>, vector<16x256xf32> -> vector<16x256xf32>
    %6 = arith.addf %3, %5 : vector<16x256xf32>
    %c0_8 = arith.constant 0 : index
    %c0_9 = arith.constant 0 : index
    %7 = vector.load %arg5[%c0_8, %c0_9] : memref<1x256xf32, #tpu.memory_space<vmem>>, vector<1x256xf32>
    %8 = vector.broadcast %7 : vector<1x256xf32> to vector<16x256xf32>
    %9 = arith.addf %6, %8 : vector<16x256xf32>
    %cst_10 = arith.constant 0.000000e+00 : f32
    %10 = vector.broadcast %cst_10 : f32 to vector<16x256xf32>
    %11 = arith.maximumf %9, %10 : vector<16x256xf32>
    %12 = arith.truncf %11 : vector<16x256xf32> to vector<16x256xbf16>
    %c0_11 = arith.constant 0 : index
    %c0_12 = arith.constant 0 : index
    %13 = vector.load %arg6[%c0_11, %c0_12] : memref<256x256xbf16, #tpu.memory_space<vmem>>, vector<256x256xbf16>
    %cst_13 = arith.constant dense<0.000000e+00> : vector<16x256xf32>
    %14 = tpu.matmul %12, %13, %cst_13 {dimension_numbers = #tpu.dot_dimension_numbers<[1], [0], [0], [1], [0, 0, 1, 1], [], []>} : vector<16x256xbf16>, vector<256x256xbf16>, vector<16x256xf32> -> vector<16x256xf32>
    %c0_14 = arith.constant 0 : index
    %c0_15 = arith.constant 0 : index
    %15 = vector.load %arg7[%c0_14, %c0_15] : memref<1x256xf32, #tpu.memory_space<vmem>>, vector<1x256xf32>
    %16 = vector.broadcast %15 : vector<1x256xf32> to vector<16x256xf32>
    %17 = arith.addf %14, %16 : vector<16x256xf32>
    %cst_16 = arith.constant 0.000000e+00 : f32
    %18 = vector.broadcast %cst_16 : f32 to vector<16x256xf32>
    %19 = arith.maximumf %17, %18 : vector<16x256xf32>
    %20 = arith.truncf %19 : vector<16x256xf32> to vector<16x256xbf16>
    %c0_17 = arith.constant 0 : index
    %c0_18 = arith.constant 0 : index
    %21 = vector.load %arg8[%c0_17, %c0_18] : memref<256x128xbf16, #tpu.memory_space<vmem>>, vector<256x128xbf16>
    %cst_19 = arith.constant dense<0.000000e+00> : vector<16x128xf32>
    %22 = tpu.matmul %20, %21, %cst_19 {dimension_numbers = #tpu.dot_dimension_numbers<[1], [0], [0], [1], [0, 0, 1, 1], [], []>} : vector<16x256xbf16>, vector<256x128xbf16>, vector<16x128xf32> -> vector<16x128xf32>
    %c0_20 = arith.constant 0 : index
    %c0_21 = arith.constant 0 : index
    %23 = vector.load %arg9[%c0_20, %c0_21] : memref<1x128xf32, #tpu.memory_space<vmem>>, vector<1x128xf32>
    %24 = vector.broadcast %23 : vector<1x128xf32> to vector<16x128xf32>
    %25 = arith.addf %22, %24 : vector<16x128xf32>
    %26 = math.tanh %25 : vector<16x128xf32>
    %cst_22 = arith.constant 1.000000e+02 : f32
    %27 = vector.broadcast %cst_22 : f32 to vector<16x128xf32>
    %28 = arith.divf %26, %27 : vector<16x128xf32>
    %c0_23 = arith.constant 0 : index
    %c0_24 = arith.constant 0 : index
    %29 = vector.load %arg10[%c0_23, %c0_24] : memref<256x128xbf16, #tpu.memory_space<vmem>>, vector<256x128xbf16>
    %cst_25 = arith.constant dense<0.000000e+00> : vector<16x128xf32>
    %30 = tpu.matmul %20, %29, %cst_25 {dimension_numbers = #tpu.dot_dimension_numbers<[1], [0], [0], [1], [0, 0, 1, 1], [], []>} : vector<16x256xbf16>, vector<256x128xbf16>, vector<16x128xf32> -> vector<16x128xf32>
    %c0_26 = arith.constant 0 : index
    %c0_27 = arith.constant 0 : index
    %31 = vector.load %arg11[%c0_26, %c0_27] : memref<1x128xf32, #tpu.memory_space<vmem>>, vector<1x128xf32>
    %32 = vector.broadcast %31 : vector<1x128xf32> to vector<16x128xf32>
    %33 = arith.addf %30, %32 : vector<16x128xf32>
    %34 = math.tanh %33 : vector<16x128xf32>
    %cst_28 = arith.constant 1.000000e+02 : f32
    %35 = vector.broadcast %cst_28 : f32 to vector<16x128xf32>
    %36 = arith.divf %34, %35 : vector<16x128xf32>
    %37 = arith.truncf %28 : vector<16x128xf32> to vector<16x128xbf16>
    %c0_29 = arith.constant 0 : index
    %c0_30 = arith.constant 0 : index
    %38 = vector.load %arg12[%c0_29, %c0_30] : memref<16x128xbf16, #tpu.memory_space<vmem>>, vector<16x128xbf16>
    tpu.vector_store %arg12[%c0_29, %c0_30], %37 {strides = array<i32>} : memref<16x128xbf16, #tpu.memory_space<vmem>>, vector<16x128xbf16>,
    %39 = arith.truncf %36 : vector<16x128xf32> to vector<16x128xbf16>
    %c0_31 = arith.constant 0 : index
    %c0_32 = arith.constant 0 : index
    %40 = vector.load %arg13[%c0_31, %c0_32] : memref<16x128xbf16, #tpu.memory_space<vmem>>, vector<16x128xbf16>
    tpu.vector_store %arg13[%c0_31, %c0_32], %39 {strides = array<i32>} : memref<16x128xbf16, #tpu.memory_space<vmem>>, vector<16x128xbf16>,
    return
  }
  func.func @transform_0(%arg0: i32) -> (i32, i32) {
    %c0_i32 = arith.constant 0 : i32
    %c0_i32_0 = arith.constant 0 : i32
    return %arg0, %c0_i32 : i32, i32
  }
  func.func @transform_1(%arg0: i32) -> (i32, i32) {
    %c0_i32 = arith.constant 0 : i32
    %c0_i32_0 = arith.constant 0 : i32
    return %arg0, %c0_i32 : i32, i32
  }
  func.func @transform_2(%arg0: i32) -> (i32, i32) {
    %c0_i32 = arith.constant 0 : i32
    %c0_i32_0 = arith.constant 0 : i32
    %c0_i32_1 = arith.constant 0 : i32
    return %c0_i32, %c0_i32_0 : i32, i32
  }
  func.func @transform_3(%arg0: i32) -> (i32, i32) {
    %c0_i32 = arith.constant 0 : i32
    %c0_i32_0 = arith.constant 0 : i32
    %c0_i32_1 = arith.constant 0 : i32
    return %c0_i32, %c0_i32_0 : i32, i32
  }
  func.func @transform_4(%arg0: i32) -> (i32, i32) {
    %c0_i32 = arith.constant 0 : i32
    %c0_i32_0 = arith.constant 0 : i32
    %c0_i32_1 = arith.constant 0 : i32
    return %c0_i32, %c0_i32_0 : i32, i32
  }
  func.func @transform_5(%arg0: i32) -> (i32, i32) {
    %c0_i32 = arith.constant 0 : i32
    %c0_i32_0 = arith.constant 0 : i32
    %c0_i32_1 = arith.constant 0 : i32
    return %c0_i32, %c0_i32_0 : i32, i32
  }
  func.func @transform_6(%arg0: i32) -> (i32, i32) {
    %c0_i32 = arith.constant 0 : i32
    %c0_i32_0 = arith.constant 0 : i32
    %c0_i32_1 = arith.constant 0 : i32
    return %c0_i32, %c0_i32_0 : i32, i32
  }
  func.func @transform_7(%arg0: i32) -> (i32, i32) {
    %c0_i32 = arith.constant 0 : i32
    %c0_i32_0 = arith.constant 0 : i32
    %c0_i32_1 = arith.constant 0 : i32
    return %c0_i32, %c0_i32_0 : i32, i32
  }
  func.func @transform_8(%arg0: i32) -> (i32, i32) {
    %c0_i32 = arith.constant 0 : i32
    %c0_i32_0 = arith.constant 0 : i32
    %c0_i32_1 = arith.constant 0 : i32
    return %c0_i32, %c0_i32_0 : i32, i32
  }
  func.func @transform_9(%arg0: i32) -> (i32, i32) {
    %c0_i32 = arith.constant 0 : i32
    %c0_i32_0 = arith.constant 0 : i32
    %c0_i32_1 = arith.constant 0 : i32
    return %c0_i32, %c0_i32_0 : i32, i32
  }
  func.func @transform_10(%arg0: i32) -> (i32, i32) {
    %c0_i32 = arith.constant 0 : i32
    %c0_i32_0 = arith.constant 0 : i32
    %c0_i32_1 = arith.constant 0 : i32
    return %c0_i32, %c0_i32_0 : i32, i32
  }
  func.func @transform_11(%arg0: i32) -> (i32, i32) {
    %c0_i32 = arith.constant 0 : i32
    %c0_i32_0 = arith.constant 0 : i32
    return %arg0, %c0_i32 : i32, i32
  }
  func.func @transform_12(%arg0: i32) -> (i32, i32) {
    %c0_i32 = arith.constant 0 : i32
    %c0_i32_0 = arith.constant 0 : i32
    return %arg0, %c0_i32 : i32, i32
  }
}

</mosaic_0001>

<llo_original>
// kernel: tpu_custom_call.1
$region0: #{tpu_custom_call.1}
  #allocation0 [shape = 'u32[]', space=smem, size = 0x4, offset = 0x4, fixed_abs, tag = 'smem constant byte address 0x4 - core index']
  #allocation1 [shape = 'u32[144,128]{1,0:T(1,128)}', space=vmem, size = 0x12000, scoped, tag = 'internal scratch']
  %s0 = inlined_call_operand.vmem [shape: bf16[16,8], index: 0, kind: input, shape index: {}]
  %s1 = inlined_call_operand.vmem [shape: bf16[16,64], index: 1, kind: input, shape index: {}]
  %s2 = inlined_call_operand.hbm [shape: bf16[8,256], index: 2, kind: input, shape index: {}]
  %s3 = inlined_call_operand.hbm [shape: bf16[64,256], index: 3, kind: input, shape index: {}]
  %s4 = inlined_call_operand.vmem [shape: f32[1,256], index: 4, kind: input, shape index: {}]
  %s5 = inlined_call_operand.hbm [shape: bf16[256,256], index: 5, kind: input, shape index: {}]
  %s6 = inlined_call_operand.vmem [shape: f32[1,256], index: 6, kind: input, shape index: {}]
  %s7 = inlined_call_operand.hbm [shape: bf16[256,128], index: 7, kind: input, shape index: {}]
  %s8 = inlined_call_operand.vmem [shape: f32[1,128], index: 8, kind: input, shape index: {}]
  %s9 = inlined_call_operand.hbm [shape: bf16[256,128], index: 9, kind: input, shape index: {}]
  %s10 = inlined_call_operand.vmem [shape: f32[1,128], index: 10, kind: input, shape index: {}]
  %s11 = inlined_call_operand.hbm [shape: bf16[16,128], index: 11, kind: output, shape index: {0}]
  %s12 = inlined_call_operand.hbm [shape: bf16[16,128], index: 12, kind: output, shape index: {1}]
  %13 = xla_tuple %s11, %s12
  %s14 = sld [smem:[#allocation0]]
  $region82: #{tpu_custom_call.1} parent=0
    _
  %s16 = ssub.s32 1, %s14
  %s17 = scalar_select 0, %s16, %s14
  $region1: #{tpu_custom_call.1} parent=0
    #allocation2 [shape = 'u8[4096]{0}', space=vmem, size = 0x1000, scoped, tag = 'input window, operand 2, single buffered']
    #allocation3 [shape = 's32[1]{0}', space=sflag, size = 0x4, scoped, tag = 'scoped memory for tpu_custom_call.1']
    #allocation4 [shape = 's32[1]{0}', space=sflag, size = 0x4, scoped, tag = 'scoped memory for tpu_custom_call.1']
    #allocation5 [shape = 'u8[32768]{0}', space=vmem, size = 0x8000, scoped, tag = 'input window, operand 3, single buffered']
    #allocation6 [shape = 's32[1]{0}', space=sflag, size = 0x4, scoped, tag = 'scoped memory for tpu_custom_call.1']
    #allocation7 [shape = 'u8[131072]{0}', space=vmem, size = 0x20000, scoped, tag = 'input window, operand 5, single buffered']
    #allocation8 [shape = 'u8[65536]{0}', space=vmem, size = 0x10000, scoped, tag = 'input window, operand 7, single buffered']
    #allocation9 [shape = 's32[1]{0}', space=sflag, size = 0x4, scoped, tag = 'scoped memory for tpu_custom_call.1']
    #allocation10 [shape = 'u8[65536]{0}', space=vmem, size = 0x10000, scoped, tag = 'input window, operand 9, single buffered']
    #allocation11 [shape = 'u8[4096]{0}', space=vmem, size = 0x1000, scoped, tag = 'output window, operand 0, single buffered']
    #allocation12 [shape = 'u8[4096]{0}', space=vmem, size = 0x1000, scoped, tag = 'output window, operand 1, single buffered']
    #allocation13 [shape = 's32[1]{0}', space=sflag, size = 0x4, scoped, tag = 'scoped memory for tpu_custom_call.1']
    %18 = vsyncpa [#allocation3], 0
    %19 = vsyncpa [#allocation6], 0
    %20 = vsyncpa [#allocation9], 0
    %21 = vsyncpa [#allocation4], 0
    %22 = vsyncpa [#allocation13], 0
    // Predicated region
    $region2: #{tpu_custom_call.1} parent=1 // pred_check
      _
    $region3: #{tpu_custom_call.1} parent=1 // pred_check_branch
      %24 = sbr.rel (0) target = $region5
    $region4: #{tpu_custom_call.1} parent=1 // pred_region
      _
    $region5: #{tpu_custom_call.1} parent=1 // pred_fallthru
      _
    // Predicated region
    $region6: #{tpu_custom_call.1} parent=1 // pred_check
      _
    $region7: #{tpu_custom_call.1} parent=1 // pred_check_branch
      %26 = sbr.rel (0) target = $region9
    $region8: #{tpu_custom_call.1} parent=1 // pred_region
      _
    $region9: #{tpu_custom_call.1} parent=1 // pred_fallthru
      _
    // Predicated region
    $region10: #{tpu_custom_call.1} parent=1 // pred_check
      _
    $region11: #{tpu_custom_call.1} parent=1 // pred_check_branch
      %28 = sbr.rel (0) target = $region13
    $region12: #{tpu_custom_call.1} parent=1 // pred_region
      %s30 = ssub.s32 128, 128
      %31 = vsyncadd [#allocation3], %s30
      %s33 = sshll.u32 [#allocation2], 4
      %s34 = int_to_ptr.vmem [resolvable:$true] %s33
      %36 = dma.hbm_to_vmem [thread:$0]  %s2, 128, %s34, [#allocation3]
    $region13: #{tpu_custom_call.1} parent=1 // pred_fallthru
      _
    // Predicated region
    $region14: #{tpu_custom_call.1} parent=1 // pred_check
      _
    $region15: #{tpu_custom_call.1} parent=1 // pred_check_branch
      %38 = sbr.rel (0) target = $region17
    $region16: #{tpu_custom_call.1} parent=1 // pred_region
      %s40 = ssub.s32 1024, 1024
      %41 = vsyncadd [#allocation6], %s40
      %s42 = sshll.u32 [#allocation5], 4
      %s43 = int_to_ptr.vmem [resolvable:$true] %s42
      %48 = dma.hbm_to_vmem [thread:$0]  %s3, 1024, %s43, [#allocation6], 128, 128, 8
    $region17: #{tpu_custom_call.1} parent=1 // pred_fallthru
      _
    // Predicated region
    $region18: #{tpu_custom_call.1} parent=1 // pred_check
      _
    $region19: #{tpu_custom_call.1} parent=1 // pred_check_branch
      %50 = sbr.rel (0) target = $region21
    $region20: #{tpu_custom_call.1} parent=1 // pred_region
      _
    $region21: #{tpu_custom_call.1} parent=1 // pred_fallthru
      _
    // Predicated region
    $region22: #{tpu_custom_call.1} parent=1 // pred_check
      _
    $region23: #{tpu_custom_call.1} parent=1 // pred_check_branch
      %52 = sbr.rel (0) target = $region25
    $region24: #{tpu_custom_call.1} parent=1 // pred_region
      %s54 = ssub.s32 4096, 4096
      %55 = vsyncadd [#allocation6], %s54
      %s56 = sshll.u32 [#allocation7], 4
      %s57 = int_to_ptr.vmem [resolvable:$true] %s56
      %62 = dma.hbm_to_vmem [thread:$0]  %s5, 4096, %s57, [#allocation6], 128, 128, 8
    $region25: #{tpu_custom_call.1} parent=1 // pred_fallthru
      _
    // Predicated region
    $region26: #{tpu_custom_call.1} parent=1 // pred_check
      _
    $region27: #{tpu_custom_call.1} parent=1 // pred_check_branch
      %64 = sbr.rel (0) target = $region29
    $region28: #{tpu_custom_call.1} parent=1 // pred_region
      _
    $region29: #{tpu_custom_call.1} parent=1 // pred_fallthru
      _
    // Predicated region
    $region30: #{tpu_custom_call.1} parent=1 // pred_check
      _
    $region31: #{tpu_custom_call.1} parent=1 // pred_check_branch
      %66 = sbr.rel (0) target = $region33
    $region32: #{tpu_custom_call.1} parent=1 // pred_region
      %s68 = ssub.s32 2048, 2048
      %69 = vsyncadd [#allocation9], %s68
      %s70 = sshll.u32 [#allocation8], 4
      %s71 = int_to_ptr.vmem [resolvable:$true] %s70
      %76 = dma.hbm_to_vmem [thread:$0]  %s7, 2048, %s71, [#allocation9], 64, 64, 4
    $region33: #{tpu_custom_call.1} parent=1 // pred_fallthru
      _
    // Predicated region
    $region34: #{tpu_custom_call.1} parent=1 // pred_check
      _
    $region35: #{tpu_custom_call.1} parent=1 // pred_check_branch
      %78 = sbr.rel (0) target = $region37
    $region36: #{tpu_custom_call.1} parent=1 // pred_region
      _
    $region37: #{tpu_custom_call.1} parent=1 // pred_fallthru
      _
    // Predicated region
    $region38: #{tpu_custom_call.1} parent=1 // pred_check
      _
    $region39: #{tpu_custom_call.1} parent=1 // pred_check_branch
      %80 = sbr.rel (0) target = $region41
    $region40: #{tpu_custom_call.1} parent=1 // pred_region
      %s82 = ssub.s32 2048, 2048
      %83 = vsyncadd [#allocation9], %s82
      %s84 = sshll.u32 [#allocation10], 4
      %s85 = int_to_ptr.vmem [resolvable:$true] %s84
      %90 = dma.hbm_to_vmem [thread:$0]  %s9, 2048, %s85, [#allocation9], 64, 64, 4
    $region41: #{tpu_custom_call.1} parent=1 // pred_fallthru
      _
    // Predicated region
    $region42: #{tpu_custom_call.1} parent=1 // pred_check
      _
    $region43: #{tpu_custom_call.1} parent=1 // pred_check_branch
      %92 = sbr.rel (0) target = $region45
    $region44: #{tpu_custom_call.1} parent=1 // pred_region
      _
    $region45: #{tpu_custom_call.1} parent=1 // pred_fallthru
      _
    // Predicated region
    $region46: #{tpu_custom_call.1} parent=1 // pred_check
      _
    $region47: #{tpu_custom_call.1} parent=1 // pred_check_branch
      %94 = sbr.rel (0) target = $region49
    $region48: #{tpu_custom_call.1} parent=1 // pred_region
      %95 = dma.done [#allocation3], 128
    $region49: #{tpu_custom_call.1} parent=1 // pred_fallthru
      _
    // Predicated region
    $region50: #{tpu_custom_call.1} parent=1 // pred_check
      _
    $region51: #{tpu_custom_call.1} parent=1 // pred_check_branch
      %97 = sbr.rel (0) target = $region53
    $region52: #{tpu_custom_call.1} parent=1 // pred_region
      %98 = dma.done [#allocation6], 1024
    $region53: #{tpu_custom_call.1} parent=1 // pred_fallthru
      _
    // Predicated region
    $region54: #{tpu_custom_call.1} parent=1 // pred_check
      _
    $region55: #{tpu_custom_call.1} parent=1 // pred_check_branch
      %100 = sbr.rel (0) target = $region57
    $region56: #{tpu_custom_call.1} parent=1 // pred_region
      %101 = dma.done [#allocation6], 4096
    $region57: #{tpu_custom_call.1} parent=1 // pred_fallthru
      _
    // Predicated region
    $region58: #{tpu_custom_call.1} parent=1 // pred_check
      _
    $region59: #{tpu_custom_call.1} parent=1 // pred_check_branch
      %103 = sbr.rel (0) target = $region61
    $region60: #{tpu_custom_call.1} parent=1 // pred_region
      %104 = dma.done [#allocation9], 2048
    $region61: #{tpu_custom_call.1} parent=1 // pred_fallthru
      _
    // Predicated region
    $region62: #{tpu_custom_call.1} parent=1 // pred_check
      _
    $region63: #{tpu_custom_call.1} parent=1 // pred_check_branch
      %106 = sbr.rel (0) target = $region65
    $region64: #{tpu_custom_call.1} parent=1 // pred_region
      %107 = dma.done [#allocation9], 2048
    $region65: #{tpu_custom_call.1} parent=1 // pred_fallthru
      _
    %v109 = vld [vmem:[%s0] sm:$0xf]
    %v110 = vld [vmem:[%s0 + $0x4] sm:$0xf]
    %v111 = vld [vmem:[%s1] sm:$0xf]
    %v112 = vld [vmem:[%s1 + $0x4] sm:$0xf]
    %v113 = vld [vmem:[#allocation2] sm:$0xff]
    %v114 = vld [vmem:[#allocation5] sm:$0xff]
    %v115 = vld [vmem:[#allocation5 + $0x8] sm:$0xff]
    %v116 = vld [vmem:[#allocation5 + $0x10] sm:$0xff]
    %v117 = vld [vmem:[#allocation5 + $0x18] sm:$0xff]
    %v118 = vld [vmem:[#allocation5 + $0x20] sm:$0xff]
    %v119 = vld [vmem:[#allocation5 + $0x28] sm:$0xff]
    %v120 = vld [vmem:[#allocation5 + $0x30] sm:$0xff]
    %v121 = vld [vmem:[#allocation5 + $0x38] sm:$0xff]
    %v124 = vunpack.c.l.b16 %v111
    %v125 = vunpack.c.l.b16 %v112
    %v126 = vpack.c.b16 %v125, %v124
    %v135 = vunpack.c.l.b16 %v114
    %v136 = vunpack.c.h.b16 %v114
    %v137 = vunpack.c.l.b16 %v115
    %v138 = vunpack.c.h.b16 %v115
    %v139 = vunpack.c.l.b16 %v116
    %v140 = vunpack.c.h.b16 %v116
    %v141 = vunpack.c.l.b16 %v117
    %v142 = vunpack.c.h.b16 %v117
    %v143 = vunpack.c.l.b16 %v118
    %v144 = vunpack.c.h.b16 %v118
    %v145 = vunpack.c.l.b16 %v119
    %v146 = vunpack.c.h.b16 %v119
    %v147 = vunpack.c.l.b16 %v120
    %v148 = vunpack.c.h.b16 %v120
    %v149 = vunpack.c.l.b16 %v121
    %v150 = vunpack.c.h.b16 %v121
    %v151 = vpack.c.b16 %v137, %v135
    %v152 = vpack.c.b16 %v138, %v136
    %v153 = vpack.c.b16 %v141, %v139
    %v154 = vpack.c.b16 %v142, %v140
    %v155 = vpack.c.b16 %v145, %v143
    %v156 = vpack.c.b16 %v146, %v144
    %v157 = vpack.c.b16 %v149, %v147
    %v158 = vpack.c.b16 %v150, %v148
    %vm167 = vcmask 523264
    %v169 = vsel %vm167, %v126, 0
    %171 = vmatprep.subr.bf16.mxu0 0
    %172 = vmatpush1.bf16.msra.mxu0 0
    %173 = vmatprep.subr.bf16.mxu0 0
    %174 = vmatpush1.bf16.msra.mxu0 0
    %175 = vmatprep.subr.bf16.mxu0 0
    %176 = vmatpush1.bf16.msra.mxu0 0
    %177 = vmatprep.subr.bf16.mxu0 0
    %178 = vmatpush1.bf16.msra.mxu0 0
    %179 = vmatprep.subr.bf16.mxu0 %v158
    %180 = vmatpush1.bf16.msra.mxu0 %v157
    %181 = vmatprep.subr.bf16.mxu0 %v156
    %182 = vmatpush1.bf16.msra.mxu0 %v155
    %183 = vmatprep.subr.bf16.mxu0 %v154
    %184 = vmatpush1.bf16.msra.mxu0 %v153
    %185 = vmatprep.subr.bf16.mxu0 %v152
    %186 = vmatpush1.bf16.msra.mxu0 %v151
    %187 = vmatprep.subr.bf16.mxu0 0
    %188 = vmatpush2.bf16.msra.mxu0 0
    %189 = vmatprep.subr.bf16.mxu0 0
    %190 = vmatpush2.bf16.msra.mxu0 0
    %191 = vmatprep.subr.bf16.mxu0 0
    %192 = vmatpush2.bf16.msra.mxu0 0
    %193 = vmatprep.subr.bf16.mxu0 0
    %194 = vmatpush2.bf16.msra.mxu0 0
    %195 = vmatprep.subr.bf16.mxu0 0
    %196 = vmatpush2.bf16.msra.mxu0 0
    %197 = vmatprep.subr.bf16.mxu0 0
    %198 = vmatpush2.bf16.msra.mxu0 0
    %199 = vmatprep.subr.bf16.mxu0 0
    %200 = vmatpush2.bf16.msra.mxu0 0
    %201 = vmatprep.subr.bf16.mxu0 0
    %202 = vmatpush2.bf16.msra.mxu0 0
    %203 = vmatprep.mubr.bf16.mxu0 0
    %204 = vmatmul.mubr.bf16.gmra.mxu0 %v169
    %v205 = vpop.f32.mrf.mxu0
    %v206 = vadd.f32 0.0, %v205
    %v207 = vpop.f32.mrf.mxu0
    %v208 = vadd.f32 0.0, %v207
    %v209 = vpop.f32.mrf.mxu0
    %v210 = vadd.f32 0.0, %v209
    %v211 = vpop.f32.mrf.mxu0
    %v212 = vadd.f32 0.0, %v211
    %213 = vdwg.mxu0
    %v216 = vunpack.c.l.b16 %v109
    %v217 = vunpack.c.l.b16 %v110
    %v218 = vpack.c.b16 %v217, %v216
    %v220 = vunpack.c.l.b16 %v113
    %v221 = vunpack.c.h.b16 %v113
    %v222 = vpack.c.b16 %v220, %v220
    %v223 = vpack.c.b16 %v221, %v221
    %vm224 = vcmask 64512
    %v226 = vsel %vm224, %v218, 0
    %vm228 = vcmask 1043456
    %v230 = vsel %vm228, %v222, 0
    %v233 = vsel %vm228, %v223, 0
    %235 = vmatprep.subr.bf16.mxu0 0
    %236 = vmatpush1.bf16.msra.mxu0 0
    %237 = vmatprep.subr.bf16.mxu0 0
    %238 = vmatpush1.bf16.msra.mxu0 0
    %239 = vmatprep.subr.bf16.mxu0 0
    %240 = vmatpush1.bf16.msra.mxu0 0
    %241 = vmatprep.subr.bf16.mxu0 0
    %242 = vmatpush1.bf16.msra.mxu0 0
    %243 = vmatprep.subr.bf16.mxu0 0
    %244 = vmatpush1.bf16.msra.mxu0 0
    %245 = vmatprep.subr.bf16.mxu0 0
    %246 = vmatpush1.bf16.msra.mxu0 0
    %247 = vmatprep.subr.bf16.mxu0 0
    %248 = vmatpush1.bf16.msra.mxu0 0
    %249 = vmatprep.subr.bf16.mxu0 %v233
    %250 = vmatpush1.bf16.msra.mxu0 %v230
    %251 = vmatprep.subr.bf16.mxu0 0
    %252 = vmatpush2.bf16.msra.mxu0 0
    %253 = vmatprep.subr.bf16.mxu0 0
    %254 = vmatpush2.bf16.msra.mxu0 0
    %255 = vmatprep.subr.bf16.mxu0 0
    %256 = vmatpush2.bf16.msra.mxu0 0
    %257 = vmatprep.subr.bf16.mxu0 0
    %258 = vmatpush2.bf16.msra.mxu0 0
    %259 = vmatprep.subr.bf16.mxu0 0
    %260 = vmatpush2.bf16.msra.mxu0 0
    %261 = vmatprep.subr.bf16.mxu0 0
    %262 = vmatpush2.bf16.msra.mxu0 0
    %263 = vmatprep.subr.bf16.mxu0 0
    %264 = vmatpush2.bf16.msra.mxu0 0
    %265 = vmatprep.subr.bf16.mxu0 0
    %266 = vmatpush2.bf16.msra.mxu0 0
    %267 = vmatprep.mubr.bf16.mxu0 0
    %268 = vmatmul.mubr.bf16.gmra.mxu0 %v226
    %v269 = vpop.f32.mrf.mxu0
    %v270 = vadd.f32 %v206, %v269
    %v271 = vpop.f32.mrf.mxu0
    %v272 = vadd.f32 %v208, %v271
    %v273 = vpop.f32.mrf.mxu0
    %v274 = vadd.f32 %v210, %v273
    %v275 = vpop.f32.mrf.mxu0
    %v276 = vadd.f32 %v212, %v275
    %277 = vdwg.mxu0
    %v278 = vld [vmem:[%s4] sm:$0x3]
    %v280 = vlaneseq
    %v281 = vshrl.u32 %v280, 7
    %v282 = vsub.s32 0, %v281
    %v283 = vrot.slane %v278, %v282
    %v284 = vlaneseq
    %v285 = vshrl.u32 %v284, 7
    %v286 = vsub.s32 1, %v285
    %v287 = vrot.slane %v278, %v286
    %v290 = vadd.f32 %v270, %v283
    %v291 = vadd.f32 %v272, %v287
    %v292 = vadd.f32 %v274, %v283
    %v293 = vadd.f32 %v276, %v287
    %v294 = vmax.f32 %v290, 0.0
    %v295 = vmax.f32 %v291, 0.0
    %v296 = vmax.f32 %v292, 0.0
    %v297 = vmax.f32 %v293, 0.0
    %v298 = vpack.c.bf16 %v296, %v294
    %v299 = vpack.c.bf16 %v297, %v295
    %v300 = vld [vmem:[#allocation7] sm:$0xff]
    %v301 = vld [vmem:[#allocation7 + $0x8] sm:$0xff]
    %v302 = vld [vmem:[#allocation7 + $0x10] sm:$0xff]
    %v303 = vld [vmem:[#allocation7 + $0x18] sm:$0xff]
    %v304 = vld [vmem:[#allocation7 + $0x20] sm:$0xff]
    %v305 = vld [vmem:[#allocation7 + $0x28] sm:$0xff]
    %v306 = vld [vmem:[#allocation7 + $0x30] sm:$0xff]
    %v307 = vld [vmem:[#allocation7 + $0x38] sm:$0xff]
    %v308 = vld [vmem:[#allocation7 + $0x40] sm:$0xff]
    %v309 = vld [vmem:[#allocation7 + $0x48] sm:$0xff]
    %v310 = vld [vmem:[#allocation7 + $0x50] sm:$0xff]
    %v311 = vld [vmem:[#allocation7 + $0x58] sm:$0xff]
    %v312 = vld [vmem:[#allocation7 + $0x60] sm:$0xff]
    %v313 = vld [vmem:[#allocation7 + $0x68] sm:$0xff]
    %v314 = vld [vmem:[#allocation7 + $0x70] sm:$0xff]
    %v315 = vld [vmem:[#allocation7 + $0x78] sm:$0xff]
    %v316 = vld [vmem:[#allocation7 + $0x80] sm:$0xff]
    %v317 = vld [vmem:[#allocation7 + $0x88] sm:$0xff]
    %v318 = vld [vmem:[#allocation7 + $0x90] sm:$0xff]
    %v319 = vld [vmem:[#allocation7 + $0x98] sm:$0xff]
    %v320 = vld [vmem:[#allocation7 + $0xa0] sm:$0xff]
    %v321 = vld [vmem:[#allocation7 + $0xa8] sm:$0xff]
    %v322 = vld [vmem:[#allocation7 + $0xb0] sm:$0xff]
    %v323 = vld [vmem:[#allocation7 + $0xb8] sm:$0xff]
    %v324 = vld [vmem:[#allocation7 + $0xc0] sm:$0xff]
    %v325 = vld [vmem:[#allocation7 + $0xc8] sm:$0xff]
    %v326 = vld [vmem:[#allocation7 + $0xd0] sm:$0xff]
    %v327 = vld [vmem:[#allocation7 + $0xd8] sm:$0xff]
    %v328 = vld [vmem:[#allocation7 + $0xe0] sm:$0xff]
    %v329 = vld [vmem:[#allocation7 + $0xe8] sm:$0xff]
    %v330 = vld [vmem:[#allocation7 + $0xf0] sm:$0xff]
    %v331 = vld [vmem:[#allocation7 + $0xf8] sm:$0xff]
    %v332 = vld [vmem:[%s6] sm:$0x3]
    %v334 = vlaneseq
    %v335 = vshrl.u32 %v334, 7
    %v336 = vsub.s32 0, %v335
    %v337 = vrot.slane %v332, %v336
    %v338 = vlaneseq
    %v339 = vshrl.u32 %v338, 7
    %v340 = vsub.s32 1, %v339
    %v341 = vrot.slane %v332, %v340
    %v376 = vunpack.c.l.b16 %v300
    %v377 = vunpack.c.h.b16 %v300
    %v378 = vunpack.c.l.b16 %v301
    %v379 = vunpack.c.h.b16 %v301
    %v380 = vunpack.c.l.b16 %v302
    %v381 = vunpack.c.h.b16 %v302
    %v382 = vunpack.c.l.b16 %v303
    %v383 = vunpack.c.h.b16 %v303
    %v384 = vunpack.c.l.b16 %v304
    %v385 = vunpack.c.h.b16 %v304
    %v386 = vunpack.c.l.b16 %v305
    %v387 = vunpack.c.h.b16 %v305
    %v388 = vunpack.c.l.b16 %v306
    %v389 = vunpack.c.h.b16 %v306
    %v390 = vunpack.c.l.b16 %v307
    %v391 = vunpack.c.h.b16 %v307
    %v392 = vunpack.c.l.b16 %v308
    %v393 = vunpack.c.h.b16 %v308
    %v394 = vunpack.c.l.b16 %v309
    %v395 = vunpack.c.h.b16 %v309
    %v396 = vunpack.c.l.b16 %v310
    %v397 = vunpack.c.h.b16 %v310
    %v398 = vunpack.c.l.b16 %v311
    %v399 = vunpack.c.h.b16 %v311
    %v400 = vunpack.c.l.b16 %v312
    %v401 = vunpack.c.h.b16 %v312
    %v402 = vunpack.c.l.b16 %v313
    %v403 = vunpack.c.h.b16 %v313
    %v404 = vunpack.c.l.b16 %v314
    %v405 = vunpack.c.h.b16 %v314
    %v406 = vunpack.c.l.b16 %v315
    %v407 = vunpack.c.h.b16 %v315
    %v408 = vunpack.c.l.b16 %v316
    %v409 = vunpack.c.h.b16 %v316
    %v410 = vunpack.c.l.b16 %v317
    %v411 = vunpack.c.h.b16 %v317
    %v412 = vunpack.c.l.b16 %v318
    %v413 = vunpack.c.h.b16 %v318
    %v414 = vunpack.c.l.b16 %v319
    %v415 = vunpack.c.h.b16 %v319
    %v416 = vunpack.c.l.b16 %v320
    %v417 = vunpack.c.h.b16 %v320
    %v418 = vunpack.c.l.b16 %v321
    %v419 = vunpack.c.h.b16 %v321
    %v420 = vunpack.c.l.b16 %v322
    %v421 = vunpack.c.h.b16 %v322
    %v422 = vunpack.c.l.b16 %v323
    %v423 = vunpack.c.h.b16 %v323
    %v424 = vunpack.c.l.b16 %v324
    %v425 = vunpack.c.h.b16 %v324
    %v426 = vunpack.c.l.b16 %v325
    %v427 = vunpack.c.h.b16 %v325
    %v428 = vunpack.c.l.b16 %v326
    %v429 = vunpack.c.h.b16 %v326
    %v430 = vunpack.c.l.b16 %v327
    %v431 = vunpack.c.h.b16 %v327
    %v432 = vunpack.c.l.b16 %v328
    %v433 = vunpack.c.h.b16 %v328
    %v434 = vunpack.c.l.b16 %v329
    %v435 = vunpack.c.h.b16 %v329
    %v436 = vunpack.c.l.b16 %v330
    %v437 = vunpack.c.h.b16 %v330
    %v438 = vunpack.c.l.b16 %v331
    %v439 = vunpack.c.h.b16 %v331
    %v440 = vpack.c.b16 %v378, %v376
    %v441 = vpack.c.b16 %v379, %v377
    %v442 = vpack.c.b16 %v382, %v380
    %v443 = vpack.c.b16 %v383, %v381
    %v444 = vpack.c.b16 %v386, %v384
    %v445 = vpack.c.b16 %v387, %v385
    %v446 = vpack.c.b16 %v390, %v388
    %v447 = vpack.c.b16 %v391, %v389
    %v448 = vpack.c.b16 %v394, %v392
    %v449 = vpack.c.b16 %v395, %v393
    %v450 = vpack.c.b16 %v398, %v396
    %v451 = vpack.c.b16 %v399, %v397
    %v452 = vpack.c.b16 %v402, %v400
    %v453 = vpack.c.b16 %v403, %v401
    %v454 = vpack.c.b16 %v406, %v404
    %v455 = vpack.c.b16 %v407, %v405
    %v456 = vpack.c.b16 %v410, %v408
    %v457 = vpack.c.b16 %v411, %v409
    %v458 = vpack.c.b16 %v414, %v412
    %v459 = vpack.c.b16 %v415, %v413
    %v460 = vpack.c.b16 %v418, %v416
    %v461 = vpack.c.b16 %v419, %v417
    %v462 = vpack.c.b16 %v422, %v420
    %v463 = vpack.c.b16 %v423, %v421
    %v464 = vpack.c.b16 %v426, %v424
    %v465 = vpack.c.b16 %v427, %v425
    %v466 = vpack.c.b16 %v430, %v428
    %v467 = vpack.c.b16 %v431, %v429
    %v468 = vpack.c.b16 %v434, %v432
    %v469 = vpack.c.b16 %v435, %v433
    %v470 = vpack.c.b16 %v438, %v436
    %v471 = vpack.c.b16 %v439, %v437
    %504 = vmatprep.subr.bf16.mxu0 %v455
    %505 = vmatpush1.bf16.msra.mxu0 %v454
    %506 = vmatprep.subr.bf16.mxu0 %v453
    %507 = vmatpush1.bf16.msra.mxu0 %v452
    %508 = vmatprep.subr.bf16.mxu0 %v451
    %509 = vmatpush1.bf16.msra.mxu0 %v450
    %510 = vmatprep.subr.bf16.mxu0 %v449
    %511 = vmatpush1.bf16.msra.mxu0 %v448
    %512 = vmatprep.subr.bf16.mxu0 %v447
    %513 = vmatpush1.bf16.msra.mxu0 %v446
    %514 = vmatprep.subr.bf16.mxu0 %v445
    %515 = vmatpush1.bf16.msra.mxu0 %v444
    %516 = vmatprep.subr.bf16.mxu0 %v443
    %517 = vmatpush1.bf16.msra.mxu0 %v442
    %518 = vmatprep.subr.bf16.mxu0 %v441
    %519 = vmatpush1.bf16.msra.mxu0 %v440
    %520 = vmatprep.subr.bf16.mxu0 %v471
    %521 = vmatpush2.bf16.msra.mxu0 %v470
    %522 = vmatprep.subr.bf16.mxu0 %v469
    %523 = vmatpush2.bf16.msra.mxu0 %v468
    %524 = vmatprep.subr.bf16.mxu0 %v467
    %525 = vmatpush2.bf16.msra.mxu0 %v466
    %526 = vmatprep.subr.bf16.mxu0 %v465
    %527 = vmatpush2.bf16.msra.mxu0 %v464
    %528 = vmatprep.subr.bf16.mxu0 %v463
    %529 = vmatpush2.bf16.msra.mxu0 %v462
    %530 = vmatprep.subr.bf16.mxu0 %v461
    %531 = vmatpush2.bf16.msra.mxu0 %v460
    %532 = vmatprep.subr.bf16.mxu0 %v459
    %533 = vmatpush2.bf16.msra.mxu0 %v458
    %534 = vmatprep.subr.bf16.mxu0 %v457
    %535 = vmatpush2.bf16.msra.mxu0 %v456
    %536 = vmatprep.mubr.bf16.mxu0 %v299
    %537 = vmatmul.mubr.bf16.gmra.mxu0 %v298
    %v538 = vpop.f32.mrf.mxu0
    %v539 = vadd.f32 %v337, %v538
    %v540 = vpop.f32.mrf.mxu0
    %v541 = vadd.f32 %v341, %v540
    %v542 = vpop.f32.mrf.mxu0
    %v543 = vadd.f32 %v337, %v542
    %v544 = vpop.f32.mrf.mxu0
    %v545 = vadd.f32 %v341, %v544
    %546 = vdwg.mxu0
    %v547 = vmax.f32 %v539, 0.0
    %v548 = vmax.f32 %v541, 0.0
    %v549 = vmax.f32 %v543, 0.0
    %v550 = vmax.f32 %v545, 0.0
    %v551 = vpack.c.bf16 %v549, %v547
    %v552 = vpack.c.bf16 %v550, %v548
    %v553 = vld [vmem:[#allocation8] sm:$0xf]
    %v554 = vld [vmem:[#allocation8 + $0x4] sm:$0xf]
    %v555 = vld [vmem:[#allocation8 + $0x8] sm:$0xf]
    %v556 = vld [vmem:[#allocation8 + $0xc] sm:$0xf]
    %v557 = vld [vmem:[#allocation8 + $0x10] sm:$0xf]
    %v558 = vld [vmem:[#allocation8 + $0x14] sm:$0xf]
    %v559 = vld [vmem:[#allocation8 + $0x18] sm:$0xf]
    %v560 = vld [vmem:[#allocation8 + $0x1c] sm:$0xf]
    %v561 = vld [vmem:[#allocation8 + $0x20] sm:$0xf]
    %v562 = vld [vmem:[#allocation8 + $0x24] sm:$0xf]
    %v563 = vld [vmem:[#allocation8 + $0x28] sm:$0xf]
    %v564 = vld [vmem:[#allocation8 + $0x2c] sm:$0xf]
    %v565 = vld [vmem:[#allocation8 + $0x30] sm:$0xf]
    %v566 = vld [vmem:[#allocation8 + $0x34] sm:$0xf]
    %v567 = vld [vmem:[#allocation8 + $0x38] sm:$0xf]
    %v568 = vld [vmem:[#allocation8 + $0x3c] sm:$0xf]
    %v569 = vld [vmem:[#allocation8 + $0x40] sm:$0xf]
    %v570 = vld [vmem:[#allocation8 + $0x44] sm:$0xf]
    %v571 = vld [vmem:[#allocation8 + $0x48] sm:$0xf]
    %v572 = vld [vmem:[#allocation8 + $0x4c] sm:$0xf]
    %v573 = vld [vmem:[#allocation8 + $0x50] sm:$0xf]
    %v574 = vld [vmem:[#allocation8 + $0x54] sm:$0xf]
    %v575 = vld [vmem:[#allocation8 + $0x58] sm:$0xf]
    %v576 = vld [vmem:[#allocation8 + $0x5c] sm:$0xf]
    %v577 = vld [vmem:[#allocation8 + $0x60] sm:$0xf]
    %v578 = vld [vmem:[#allocation8 + $0x64] sm:$0xf]
    %v579 = vld [vmem:[#allocation8 + $0x68] sm:$0xf]
    %v580 = vld [vmem:[#allocation8 + $0x6c] sm:$0xf]
    %v581 = vld [vmem:[#allocation8 + $0x70] sm:$0xf]
    %v582 = vld [vmem:[#allocation8 + $0x74] sm:$0xf]
    %v583 = vld [vmem:[#allocation8 + $0x78] sm:$0xf]
    %v584 = vld [vmem:[#allocation8 + $0x7c] sm:$0xf]
    %v585 = vld [vmem:[%s8] sm:$0x1]
    %v587 = vlaneseq
    %v588 = vshrl.u32 %v587, 7
    %v589 = vsub.s32 0, %v588
    %v590 = vrot.slane %v585, %v589
    %v624 = vunpack.c.l.b16 %v553
    %v625 = vunpack.c.l.b16 %v554
    %v626 = vunpack.c.l.b16 %v555
    %v627 = vunpack.c.l.b16 %v556
    %v628 = vunpack.c.l.b16 %v557
    %v629 = vunpack.c.l.b16 %v558
    %v630 = vunpack.c.l.b16 %v559
    %v631 = vunpack.c.l.b16 %v560
    %v632 = vunpack.c.l.b16 %v561
    %v633 = vunpack.c.l.b16 %v562
    %v634 = vunpack.c.l.b16 %v563
    %v635 = vunpack.c.l.b16 %v564
    %v636 = vunpack.c.l.b16 %v565
    %v637 = vunpack.c.l.b16 %v566
    %v638 = vunpack.c.l.b16 %v567
    %v639 = vunpack.c.l.b16 %v568
    %v640 = vunpack.c.l.b16 %v569
    %v641 = vunpack.c.l.b16 %v570
    %v642 = vunpack.c.l.b16 %v571
    %v643 = vunpack.c.l.b16 %v572
    %v644 = vunpack.c.l.b16 %v573
    %v645 = vunpack.c.l.b16 %v574
    %v646 = vunpack.c.l.b16 %v575
    %v647 = vunpack.c.l.b16 %v576
    %v648 = vunpack.c.l.b16 %v577
    %v649 = vunpack.c.l.b16 %v578
    %v650 = vunpack.c.l.b16 %v579
    %v651 = vunpack.c.l.b16 %v580
    %v652 = vunpack.c.l.b16 %v581
    %v653 = vunpack.c.l.b16 %v582
    %v654 = vunpack.c.l.b16 %v583
    %v655 = vunpack.c.l.b16 %v584
    %v656 = vpack.c.b16 %v625, %v624
    %v657 = vpack.c.b16 %v627, %v626
    %v658 = vpack.c.b16 %v629, %v628
    %v659 = vpack.c.b16 %v631, %v630
    %v660 = vpack.c.b16 %v633, %v632
    %v661 = vpack.c.b16 %v635, %v634
    %v662 = vpack.c.b16 %v637, %v636
    %v663 = vpack.c.b16 %v639, %v638
    %v664 = vpack.c.b16 %v641, %v640
    %v665 = vpack.c.b16 %v643, %v642
    %v666 = vpack.c.b16 %v645, %v644
    %v667 = vpack.c.b16 %v647, %v646
    %v668 = vpack.c.b16 %v649, %v648
    %v669 = vpack.c.b16 %v651, %v650
    %v670 = vpack.c.b16 %v653, %v652
    %v671 = vpack.c.b16 %v655, %v654
    %688 = vmatprep.subr.bf16.mxu0 0
    %689 = vmatpush1.bf16.msra.mxu0 %v663
    %690 = vmatprep.subr.bf16.mxu0 0
    %691 = vmatpush1.bf16.msra.mxu0 %v662
    %692 = vmatprep.subr.bf16.mxu0 0
    %693 = vmatpush1.bf16.msra.mxu0 %v661
    %694 = vmatprep.subr.bf16.mxu0 0
    %695 = vmatpush1.bf16.msra.mxu0 %v660
    %696 = vmatprep.subr.bf16.mxu0 0
    %697 = vmatpush1.bf16.msra.mxu0 %v659
    %698 = vmatprep.subr.bf16.mxu0 0
    %699 = vmatpush1.bf16.msra.mxu0 %v658
    %700 = vmatprep.subr.bf16.mxu0 0
    %701 = vmatpush1.bf16.msra.mxu0 %v657
    %702 = vmatprep.subr.bf16.mxu0 0
    %703 = vmatpush1.bf16.msra.mxu0 %v656
    %704 = vmatprep.subr.bf16.mxu0 0
    %705 = vmatpush2.bf16.msra.mxu0 %v671
    %706 = vmatprep.subr.bf16.mxu0 0
    %707 = vmatpush2.bf16.msra.mxu0 %v670
    %708 = vmatprep.subr.bf16.mxu0 0
    %709 = vmatpush2.bf16.msra.mxu0 %v669
    %710 = vmatprep.subr.bf16.mxu0 0
    %711 = vmatpush2.bf16.msra.mxu0 %v668
    %712 = vmatprep.subr.bf16.mxu0 0
    %713 = vmatpush2.bf16.msra.mxu0 %v667
    %714 = vmatprep.subr.bf16.mxu0 0
    %715 = vmatpush2.bf16.msra.mxu0 %v666
    %716 = vmatprep.subr.bf16.mxu0 0
    %717 = vmatpush2.bf16.msra.mxu0 %v665
    %718 = vmatprep.subr.bf16.mxu0 0
    %719 = vmatpush2.bf16.msra.mxu0 %v664
    %720 = vmatprep.mubr.bf16.mxu0 %v552
    %721 = vmatmul.mubr.bf16.gmra.mxu0 %v551
    %v722 = vpop.f32.mrf.mxu0
    %v723 = vadd.f32 %v590, %v722
    %v724 = vpop.f32.mrf.mxu0
    %v725 = vpop.f32.mrf.mxu0
    %v726 = vadd.f32 %v590, %v725
    %v727 = vpop.f32.mrf.mxu0
    %728 = vdwg.mxu0
    %v729 = vtanh.pop %v723
    %v730 = vtanh.pop %v726
    %v731 = vrcp.pop 100.0
    %v732 = vmul.f32 %v729, %v731
    %v733 = vmul.f32 %v730, %v731
    %v734 = vld [vmem:[#allocation10] sm:$0xf]
    %v735 = vld [vmem:[#allocation10 + $0x4] sm:$0xf]
    %v736 = vld [vmem:[#allocation10 + $0x8] sm:$0xf]
    %v737 = vld [vmem:[#allocation10 + $0xc] sm:$0xf]
    %v738 = vld [vmem:[#allocation10 + $0x10] sm:$0xf]
    %v739 = vld [vmem:[#allocation10 + $0x14] sm:$0xf]
    %v740 = vld [vmem:[#allocation10 + $0x18] sm:$0xf]
    %v741 = vld [vmem:[#allocation10 + $0x1c] sm:$0xf]
    %v742 = vld [vmem:[#allocation10 + $0x20] sm:$0xf]
    %v743 = vld [vmem:[#allocation10 + $0x24] sm:$0xf]
    %v744 = vld [vmem:[#allocation10 + $0x28] sm:$0xf]
    %v745 = vld [vmem:[#allocation10 + $0x2c] sm:$0xf]
    %v746 = vld [vmem:[#allocation10 + $0x30] sm:$0xf]
    %v747 = vld [vmem:[#allocation10 + $0x34] sm:$0xf]
    %v748 = vld [vmem:[#allocation10 + $0x38] sm:$0xf]
    %v749 = vld [vmem:[#allocation10 + $0x3c] sm:$0xf]
    %v750 = vld [vmem:[#allocation10 + $0x40] sm:$0xf]
    %v751 = vld [vmem:[#allocation10 + $0x44] sm:$0xf]
    %v752 = vld [vmem:[#allocation10 + $0x48] sm:$0xf]
    %v753 = vld [vmem:[#allocation10 + $0x4c] sm:$0xf]
    %v754 = vld [vmem:[#allocation10 + $0x50] sm:$0xf]
    %v755 = vld [vmem:[#allocation10 + $0x54] sm:$0xf]
    %v756 = vld [vmem:[#allocation10 + $0x58] sm:$0xf]
    %v757 = vld [vmem:[#allocation10 + $0x5c] sm:$0xf]
    %v758 = vld [vmem:[#allocation10 + $0x60] sm:$0xf]
    %v759 = vld [vmem:[#allocation10 + $0x64] sm:$0xf]
    %v760 = vld [vmem:[#allocation10 + $0x68] sm:$0xf]
    %v761 = vld [vmem:[#allocation10 + $0x6c] sm:$0xf]
    %v762 = vld [vmem:[#allocation10 + $0x70] sm:$0xf]
    %v763 = vld [vmem:[#allocation10 + $0x74] sm:$0xf]
    %v764 = vld [vmem:[#allocation10 + $0x78] sm:$0xf]
    %v765 = vld [vmem:[#allocation10 + $0x7c] sm:$0xf]
    %v766 = vld [vmem:[%s10] sm:$0x1]
    %v768 = vlaneseq
    %v769 = vshrl.u32 %v768, 7
    %v770 = vsub.s32 0, %v769
    %v771 = vrot.slane %v766, %v770
    %v805 = vunpack.c.l.b16 %v734
    %v806 = vunpack.c.l.b16 %v735
    %v807 = vunpack.c.l.b16 %v736
    %v808 = vunpack.c.l.b16 %v737
    %v809 = vunpack.c.l.b16 %v738
    %v810 = vunpack.c.l.b16 %v739
    %v811 = vunpack.c.l.b16 %v740
    %v812 = vunpack.c.l.b16 %v741
    %v813 = vunpack.c.l.b16 %v742
    %v814 = vunpack.c.l.b16 %v743
    %v815 = vunpack.c.l.b16 %v744
    %v816 = vunpack.c.l.b16 %v745
    %v817 = vunpack.c.l.b16 %v746
    %v818 = vunpack.c.l.b16 %v747
    %v819 = vunpack.c.l.b16 %v748
    %v820 = vunpack.c.l.b16 %v749
    %v821 = vunpack.c.l.b16 %v750
    %v822 = vunpack.c.l.b16 %v751
    %v823 = vunpack.c.l.b16 %v752
    %v824 = vunpack.c.l.b16 %v753
    %v825 = vunpack.c.l.b16 %v754
    %v826 = vunpack.c.l.b16 %v755
    %v827 = vunpack.c.l.b16 %v756
    %v828 = vunpack.c.l.b16 %v757
    %v829 = vunpack.c.l.b16 %v758
    %v830 = vunpack.c.l.b16 %v759
    %v831 = vunpack.c.l.b16 %v760
    %v832 = vunpack.c.l.b16 %v761
    %v833 = vunpack.c.l.b16 %v762
    %v834 = vunpack.c.l.b16 %v763
    %v835 = vunpack.c.l.b16 %v764
    %v836 = vunpack.c.l.b16 %v765
    %v837 = vpack.c.b16 %v806, %v805
    %v838 = vpack.c.b16 %v808, %v807
    %v839 = vpack.c.b16 %v810, %v809
    %v840 = vpack.c.b16 %v812, %v811
    %v841 = vpack.c.b16 %v814, %v813
    %v842 = vpack.c.b16 %v816, %v815
    %v843 = vpack.c.b16 %v818, %v817
    %v844 = vpack.c.b16 %v820, %v819
    %v845 = vpack.c.b16 %v822, %v821
    %v846 = vpack.c.b16 %v824, %v823
    %v847 = vpack.c.b16 %v826, %v825
    %v848 = vpack.c.b16 %v828, %v827
    %v849 = vpack.c.b16 %v830, %v829
    %v850 = vpack.c.b16 %v832, %v831
    %v851 = vpack.c.b16 %v834, %v833
    %v852 = vpack.c.b16 %v836, %v835
    %869 = vmatprep.subr.bf16.mxu0 0
    %870 = vmatpush1.bf16.msra.mxu0 %v844
    %871 = vmatprep.subr.bf16.mxu0 0
    %872 = vmatpush1.bf16.msra.mxu0 %v843
    %873 = vmatprep.subr.bf16.mxu0 0
    %874 = vmatpush1.bf16.msra.mxu0 %v842
    %875 = vmatprep.subr.bf16.mxu0 0
    %876 = vmatpush1.bf16.msra.mxu0 %v841
    %877 = vmatprep.subr.bf16.mxu0 0
    %878 = vmatpush1.bf16.msra.mxu0 %v840
    %879 = vmatprep.subr.bf16.mxu0 0
    %880 = vmatpush1.bf16.msra.mxu0 %v839
    %881 = vmatprep.subr.bf16.mxu0 0
    %882 = vmatpush1.bf16.msra.mxu0 %v838
    %883 = vmatprep.subr.bf16.mxu0 0
    %884 = vmatpush1.bf16.msra.mxu0 %v837
    %885 = vmatprep.subr.bf16.mxu0 0
    %886 = vmatpush2.bf16.msra.mxu0 %v852
    %887 = vmatprep.subr.bf16.mxu0 0
    %888 = vmatpush2.bf16.msra.mxu0 %v851
    %889 = vmatprep.subr.bf16.mxu0 0
    %890 = vmatpush2.bf16.msra.mxu0 %v850
    %891 = vmatprep.subr.bf16.mxu0 0
    %892 = vmatpush2.bf16.msra.mxu0 %v849
    %893 = vmatprep.subr.bf16.mxu0 0
    %894 = vmatpush2.bf16.msra.mxu0 %v848
    %895 = vmatprep.subr.bf16.mxu0 0
    %896 = vmatpush2.bf16.msra.mxu0 %v847
    %897 = vmatprep.subr.bf16.mxu0 0
    %898 = vmatpush2.bf16.msra.mxu0 %v846
    %899 = vmatprep.subr.bf16.mxu0 0
    %900 = vmatpush2.bf16.msra.mxu0 %v845
    %901 = vmatprep.mubr.bf16.mxu0 %v552
    %902 = vmatmul.mubr.bf16.gmra.mxu0 %v551
    %v903 = vpop.f32.mrf.mxu0
    %v904 = vadd.f32 %v771, %v903
    %v905 = vpop.f32.mrf.mxu0
    %v906 = vpop.f32.mrf.mxu0
    %v907 = vadd.f32 %v771, %v906
    %v908 = vpop.f32.mrf.mxu0
    %909 = vdwg.mxu0
    %v910 = vtanh.pop %v904
    %v911 = vtanh.pop %v907
    %v912 = vmul.f32 %v910, %v731
    %v913 = vmul.f32 %v911, %v731
    %v914 = vpack.c.bf16 %v733, %v732
    %v916 = vunpack.c.l.b16 %v914
    %v917 = vunpack.c.h.b16 %v914
    %v918 = vpack.c.b16 %v916, %v916
    %v919 = vpack.c.b16 %v917, %v917
    %922 = vst [vmem:[#allocation11] sm:$0xf] %v918
    %923 = vst [vmem:[#allocation11 + $0x4] sm:$0xf] %v919
    %v924 = vpack.c.bf16 %v913, %v912
    %v926 = vunpack.c.l.b16 %v924
    %v927 = vunpack.c.h.b16 %v924
    %v928 = vpack.c.b16 %v926, %v926
    %v929 = vpack.c.b16 %v927, %v927
    %932 = vst [vmem:[#allocation12] sm:$0xf] %v928
    %933 = vst [vmem:[#allocation12 + $0x4] sm:$0xf] %v929
    // Predicated region
    $region66: #{tpu_custom_call.1} parent=1 // pred_check
      _
    $region67: #{tpu_custom_call.1} parent=1 // pred_check_branch
      %935 = sbr.rel (0) target = $region69
    $region68: #{tpu_custom_call.1} parent=1 // pred_region
      %s937 = ssub.s32 128, 128
      %938 = vsyncadd [#allocation4], %s937
      %s939 = sshll.u32 [#allocation11], 4
      %s940 = int_to_ptr.vmem [resolvable:$true] %s939
      %945 = dma.vmem_to_hbm [thread:$0]  %s940, 128, %s11, [#allocation4], 64, 64, 4
    $region69: #{tpu_custom_call.1} parent=1 // pred_fallthru
      _
    // Predicated region
    $region70: #{tpu_custom_call.1} parent=1 // pred_check
      _
    $region71: #{tpu_custom_call.1} parent=1 // pred_check_branch
      %947 = sbr.rel (0) target = $region73
    $region72: #{tpu_custom_call.1} parent=1 // pred_region
      %s949 = ssub.s32 128, 128
      %950 = vsyncadd [#allocation13], %s949
      %s951 = sshll.u32 [#allocation12], 4
      %s952 = int_to_ptr.vmem [resolvable:$true] %s951
      %957 = dma.vmem_to_hbm [thread:$0]  %s952, 128, %s12, [#allocation13], 64, 64, 4
    $region73: #{tpu_custom_call.1} parent=1 // pred_fallthru
      _
    // Predicated region
    $region74: #{tpu_custom_call.1} parent=1 // pred_check
      _
    $region75: #{tpu_custom_call.1} parent=1 // pred_check_branch
      %959 = sbr.rel (0) target = $region77
    $region76: #{tpu_custom_call.1} parent=1 // pred_region
      %960 = dma.done [#allocation4], 128
    $region77: #{tpu_custom_call.1} parent=1 // pred_fallthru
      _
    // Predicated region
    $region78: #{tpu_custom_call.1} parent=1 // pred_check
      _
    $region79: #{tpu_custom_call.1} parent=1 // pred_check_branch
      %962 = sbr.rel (0) target = $region81
    $region80: #{tpu_custom_call.1} parent=1 // pred_region
      %963 = dma.done [#allocation13], 128
    $region81: #{tpu_custom_call.1} parent=1 // pred_fallthru
      _
    %964 = vsyncpa [#allocation3], 1
    %965 = vsyncpa [#allocation6], 1
    %966 = vsyncpa [#allocation9], 1
    %967 = vsyncpa [#allocation4], 1
    %968 = vsyncpa [#allocation13], 1

</llo_original>
